<compile_context>
chip_gen: v5e
topology: v5e:2x2
jax: 0.10.0
libtpu: 0.0.40
codegen_flags: <defaults>
</compile_context>

<pallas_src>
import functools

import numpy as np
import jax
import jax.numpy as jnp
from jax.experimental import pallas as pl
from jax.experimental.pallas import tpu as pltpu

LANE = 128
TILE_CAP = 16384   # pixel-tile cap (lanes); keeps kernels well under 32 MiB VMEM
ROW_CAP = 16       # row-block cap (sublanes)


def _pick_tile(n, cap=TILE_CAP):
    """Largest multiple-of-LANE divisor of n that is <= cap.

    TODO(synk): an unlucky N (prime*128) degrades the tile toward 128; padding
    N would change the negative-pixel statistics, so it is not done here.
    """
    t = min(cap, n)
    t -= t % LANE
    while n % t:
        t -= LANE
    return t


def _pick_rows(rows, cap=ROW_CAP):
    """Row-block size.

    Prefer a multiple-of-8 divisor that yields >= 2 row blocks so the
    "parallel" grid axis can be sharded across TensorCores (v7x megacore);
    otherwise fall back to all rows (still legal: equals the full dim).
    """
    cands = [rb for rb in range(8, min(rows, cap + 1), 8) if rows % rb == 0]
    return max(cands) if cands else rows


# ---------------------------------------------------------------------------
# Kernel 1: fused region+affinity masked squared error + per-row OHEM stats
# ---------------------------------------------------------------------------
def _mse_stats_kernel(gt_r_ref, gt_a_ref, pr_r_ref, pr_a_ref, conf_ref,
                      loss_r_ref, loss_a_ref,
                      npos_r_ref, possum_r_ref, negsum_r_ref,
                      npos_a_ref, possum_a_ref, negsum_a_ref,
                      np_r_acc, ps_r_acc, ns_r_acc,
                      np_a_acc, ps_a_acc, ns_a_acc):
    j = pl.program_id(1)

    @pl.when(j == 0)
    def _():
        for acc in (np_r_acc, ps_r_acc, ns_r_acc, np_a_acc, ps_a_acc, ns_a_acc):
            acc[...] = jnp.zeros_like(acc)

    conf = conf_ref[...]  # read once, shared by both paths

    def one_path(gt_ref, pr_ref, loss_ref, np_acc, ps_acc, ns_acc):
        gt = gt_ref[...]
        d = pr_ref[...] - gt
        loss = d * d * conf
        pos = gt >= 0.1
        posf = pos.astype(jnp.float32)
        # Full-tile VPU accumulators: no per-step cross-lane (XLU) reduction.
        np_acc[...] += posf
        ps_acc[...] += loss * posf
        ns_acc[...] += jnp.where(pos, 0.0, loss)
        # Sort-ready loss map: positives -> -1 sentinel (masked MSE >= 0, so
        # sentinels sort strictly first in an ascending sort).
        loss_ref[...] = jnp.where(pos, -1.0, loss)

    one_path(gt_r_ref, pr_r_ref, loss_r_ref, np_r_acc, ps_r_acc, ns_r_acc)
    one_path(gt_a_ref, pr_a_ref, loss_a_ref, np_a_acc, ps_a_acc, ns_a_acc)

    @pl.when(j == pl.num_programs(1) - 1)
    def _():
        def finalize(acc, out_ref):
            out_ref[...] = jnp.broadcast_to(
                jnp.sum(acc[...], axis=1, keepdims=True), out_ref.shape)
        finalize(np_r_acc, npos_r_ref)
        finalize(ps_r_acc, possum_r_ref)
        finalize(ns_r_acc, negsum_r_ref)
        finalize(np_a_acc, npos_a_ref)
        finalize(ps_a_acc, possum_a_ref)
        finalize(ns_a_acc, negsum_a_ref)


def mse_and_stats(gt_r, gt_a, pr_r, pr_a, conf):
    """Returns (loss_r, loss_a, npos_r, possum_r, negsum_r, npos_a, possum_a, negsum_a).

    loss_*: (B, N) masked MSE with positive pixels replaced by -1.
    stats:  (B, 128) lane-broadcast per-row scalars (read lane 0).
    """
    R, N = gt_r.shape
    tile = _pick_tile(N)
    rb = _pick_rows(R)
    grid = (R // rb, N // tile)

    big = pl.BlockSpec((rb, tile), lambda r, j: (r, j))
    stat = pl.BlockSpec((rb, LANE), lambda r, j: (r, 0))

    big_out = jax.ShapeDtypeStruct((R, N), jnp.float32)
    stat_out = jax.ShapeDtypeStruct((R, LANE), jnp.float32)

    return pl.pallas_call(
        _mse_stats_kernel,
        out_shape=(big_out, big_out,
                   stat_out, stat_out, stat_out,
                   stat_out, stat_out, stat_out),
        grid=grid,
        in_specs=[big, big, big, big, big],
        out_specs=(big, big, stat, stat, stat, stat, stat, stat),
        scratch_shapes=[pltpu.VMEM((rb, tile), jnp.float32)] * 6,
        compiler_params=pltpu.CompilerParams(
            dimension_semantics=("parallel", "arbitrary")),
    )(gt_r, gt_a, pr_r, pr_a, conf)


# ---------------------------------------------------------------------------
# Kernel 2: OHEM reduction (top-(3*n_pos) negatives / top-500 / means) with
#           scalar-prefetch DMA-skip of below-threshold pixel tiles.
# ---------------------------------------------------------------------------
def _ohem_kernel(sb_ref, negsort_ref, npos_ref, possum_ref, negsum_ref,
                 out_ref, acc_topk, acc_500, *, n_total, tile):
    r = pl.program_id(0)
    j = pl.program_id(1)

    @pl.when(j == 0)
    def _():
        acc_topk[...] = jnp.zeros_like(acc_topk)
        acc_500[...] = jnp.zeros_like(acc_500)

    n_pos = npos_ref[:, 0:1]                       # (rb, 1) float counts
    k_i = 3 * n_pos.astype(jnp.int32)              # OHEM negative budget
    thresh_k = n_total - k_i                       # first lane of the top-3*n_pos
    thresh_500 = n_total - 500                     # first lane of the top-500

    # Tiles with j < sb hold a clamped (already-needed) block: skip them.  For
    # j >= sb the loaded block index equals j, so global lane = iota + j*tile.
    @pl.when(j >= sb_ref[r])
    def _():
        x = negsort_ref[...]
        lane = jax.lax.broadcasted_iota(jnp.int32, x.shape, 1) + j * tile
        acc_topk[...] += jnp.where(lane >= thresh_k, x, 0.0)
        acc_500[...] += jnp.where(lane >= thresh_500, x, 0.0)

    @pl.when(j == pl.num_programs(1) - 1)
    def _():
        pos_sum = possum_ref[:, 0:1]
        neg_sum = negsum_ref[:, 0:1]
        n_neg = float(n_total) - n_pos
        k_f = 3.0 * n_pos
        # Safe denominators: the value of an unused branch must not be NaN.
        pos_mean = pos_sum / jnp.maximum(n_pos, 1.0)
        neg_mean_all = neg_sum / jnp.maximum(n_neg, 1.0)
        topk_sum = jnp.sum(acc_topk[...], axis=1, keepdims=True)
        topk_mean = topk_sum / jnp.maximum(k_f, 1.0)
        negative_loss = jnp.where(n_neg < k_f, neg_mean_all, topk_mean)
        # Top-500 branch: only rows with n_pos == 0 use it, and for those the
        # sorted masked loss equals the sorted raw loss, so the trailing 500
        # lanes of the ascending sort are exactly the top-500 values.
        top500 = jnp.sum(acc_500[...], axis=1, keepdims=True) / 500.0
        per_row = jnp.where(n_pos > 0.0, pos_mean + negative_loss, top500)
        out_ref[...] = jnp.broadcast_to(per_row, out_ref.shape)


def ohem_reduce(neg_sorted, n_pos, pos_sum, neg_sum):
    R, N = neg_sorted.shape
    tile = _pick_tile(N)
    rb = _pick_rows(R)
    nr = R // rb
    nj = N // tile

    # DMA-skip start tile per row block: first pixel tile that can contain any
    # lane the selection needs.  Rows whose trailing-k accumulator is unused
    # (n_neg < 3*n_pos) need nothing; rows with n_pos == 0 need the last 500.
    npv = n_pos[:, 0]
    nnv = float(N) - npv
    k3 = 3.0 * npv
    k_eff = jnp.where(npv > 0.0, jnp.where(nnv < k3, 0.0, k3), 500.0)
    needed_lane = float(N) - k_eff
    blk = jnp.floor(needed_lane.reshape(nr, rb).min(axis=1) / float(tile))
    blk_start = jnp.clip(blk, 0.0, float(nj - 1)).astype(jnp.int32)

    big = pl.BlockSpec((rb, tile), lambda r, j, sb: (r, jnp.maximum(j, sb[r])))
    stat = pl.BlockSpec((rb, LANE), lambda r, j, sb: (r, 0))

    out = pl.pallas_call(
        functools.partial(_ohem_kernel, n_total=N, tile=tile),
        out_shape=jax.ShapeDtypeStruct((R, LANE), jnp.float32),
        grid_spec=pltpu.PrefetchScalarGridSpec(
            num_scalar_prefetch=1,
            grid=(nr, nj),
            in_specs=[big, stat, stat, stat],
            out_specs=pl.BlockSpec((rb, LANE), lambda r, j, sb: (r, 0)),
            scratch_shapes=[pltpu.VMEM((rb, tile), jnp.float32)] * 2),
        compiler_params=pltpu.CompilerParams(
            dimension_semantics=("parallel", "arbitrary")),
    )(blk_start, neg_sorted, n_pos, pos_sum, neg_sum)
    return jnp.sum(out[:, 0])


# ---------------------------------------------------------------------------
# Forward (matches Loss.forward)
# ---------------------------------------------------------------------------
def craft_loss(gt_region, gt_affinity, pred_region, pred_affinity, conf_mask):
    B = gt_region.shape[0]
    N = int(np.prod(gt_region.shape[1:]))
    assert N % LANE == 0, "flattened pixel count must be a multiple of 128"
    assert N >= 500, "top-500 branch requires at least 500 pixels"

    f = lambda x: x.reshape(B, N).astype(jnp.float32)
    gt_r, gt_a = f(gt_region), f(gt_affinity)
    pr_r, pr_a = f(pred_region), f(pred_affinity)
    cm = f(conf_mask)

    (loss_r, loss_a,
     npos_r, possum_r, negsum_r,
     npos_a, possum_a, negsum_a) = mse_and_stats(gt_r, gt_a, pr_r, pr_a, cm)

    # Data-dependent-k selection support: XLA ascending sort per path.  The -1
    # sentinels (positives) sort first; descending top-k of the negatives is
    # the trailing-k slice, summed inside kernel 2 (no top_k pass needed).
    sorted_r = jnp.sort(loss_r, axis=1)
    sorted_a = jnp.sort(loss_a, axis=1)

    r_total = ohem_reduce(sorted_r, npos_r, possum_r, negsum_r)
    a_total = ohem_reduce(sorted_a, npos_a, possum_a, negsum_a)
    return (r_total + a_total) / B


# ---------------------------------------------------------------------------
# numpy reference (mirrors the PyTorch module exactly, forward values only)
# ---------------------------------------------------------------------------
def _ref_filter_loss(pred_loss, loss_label):
    B = pred_loss.shape[0]
    pred_loss = pred_loss.reshape(B, -1)
    loss_label = loss_label.reshape(B, -1)
    total = 0.0
    for i in range(B):
        pos = pred_loss[i][loss_label[i] >= 0.1]
        neg = pred_loss[i][loss_label[i] < 0.1]
        if len(pos) != 0:
            total += pos.mean()
            if len(neg) < 3 * len(pos):
                total += neg.mean()
            else:
                total += np.sort(neg)[::-1][:3 * len(pos)].mean()
        else:
            total += np.sort(pred_loss[i])[::-1][:500].mean()
    return total


def _ref_forward(gr, ga, pr, pa, cm):
    loss_r = (pr - gr) ** 2 * cm
    loss_a = (pa - ga) ** 2 * cm
    B = gr.shape[0]
    return _ref_filter_loss(loss_r, gr) / B + _ref_filter_loss(loss_a, ga) / B


if __name__ == "__main__":
    key = jax.random.PRNGKey(0)
    B, H, W = 2, 16, 32  # N = 512 (multiple of 128, >= 500 for the top-500 path)
    ks = jax.random.split(key, 5)

    u_r = jax.random.uniform(ks[0], (B, H, W), dtype=jnp.float32)
    gt_region = jnp.where(u_r < 0.85, 0.05 * u_r, u_r)      # ~15% positives -> top-k branch
    u_a = jax.random.uniform(ks[1], (B, H, W), dtype=jnp.float32)
    gt_affinity = jnp.where(u_a < 0.55, 0.05 * u_a, u_a)    # ~45% positives -> mean-all-neg branch
    pred_region = jax.random.uniform(ks[2], (B, H, W), dtype=jnp.float32)
    pred_affinity = jax.random.uniform(ks[3], (B, H, W), dtype=jnp.float32)
    confidence_mask = (jax.random.uniform(ks[4], (B, H, W)) > 0.2).astype(jnp.float32)

    out = jax.jit(craft_loss)(gt_region, gt_affinity,
                              pred_region, pred_affinity, confidence_mask)
    out = jax.block_until_ready(out)

    ref = _ref_forward(*(np.asarray(x, dtype=np.float32) for x in
                         (gt_region, gt_affinity, pred_region,
                          pred_affinity, confidence_mask)))
    np.testing.assert_allclose(float(out), float(ref), rtol=1e-4, atol=1e-5)
    print("KERNEL_OK")
</pallas_src>

<mosaic_0001>
module attributes {stable_mosaic.version = 11 : i64} {
  func.func @_mse_stats_kernel(%arg0: i32, %arg1: i32, %arg2: memref<2x512xf32, #tpu.memory_space<vmem>>, %arg3: memref<2x512xf32, #tpu.memory_space<vmem>>, %arg4: memref<2x512xf32, #tpu.memory_space<vmem>>, %arg5: memref<2x512xf32, #tpu.memory_space<vmem>>, %arg6: memref<2x512xf32, #tpu.memory_space<vmem>>, %arg7: memref<2x512xf32, #tpu.memory_space<vmem>>, %arg8: memref<2x512xf32, #tpu.memory_space<vmem>>, %arg9: memref<2x128xf32, #tpu.memory_space<vmem>>, %arg10: memref<2x128xf32, #tpu.memory_space<vmem>>, %arg11: memref<2x128xf32, #tpu.memory_space<vmem>>, %arg12: memref<2x128xf32, #tpu.memory_space<vmem>>, %arg13: memref<2x128xf32, #tpu.memory_space<vmem>>, %arg14: memref<2x128xf32, #tpu.memory_space<vmem>>, %arg15: memref<2x512xf32, #tpu.memory_space<vmem>>, %arg16: memref<2x512xf32, #tpu.memory_space<vmem>>, %arg17: memref<2x512xf32, #tpu.memory_space<vmem>>, %arg18: memref<2x512xf32, #tpu.memory_space<vmem>>, %arg19: memref<2x512xf32, #tpu.memory_space<vmem>>, %arg20: memref<2x512xf32, #tpu.memory_space<vmem>>) attributes {dimension_semantics = [#tpu.dimension_semantics<parallel>, #tpu.dimension_semantics<arbitrary>], iteration_bounds = array<i64: 1, 1>, scalar_prefetch = 0 : i64, scratch_operands = 6 : i64, tpu.core_type = #tpu.core_type<tc>, window_params = [{transform_indices = @transform_0, window_bounds = array<i64: 2, 512>}, {transform_indices = @transform_1, window_bounds = array<i64: 2, 512>}, {transform_indices = @transform_2, window_bounds = array<i64: 2, 512>}, {transform_indices = @transform_3, window_bounds = array<i64: 2, 512>}, {transform_indices = @transform_4, window_bounds = array<i64: 2, 512>}, {transform_indices = @transform_5, window_bounds = array<i64: 2, 512>}, {transform_indices = @transform_6, window_bounds = array<i64: 2, 512>}, {transform_indices = @transform_7, window_bounds = array<i64: 2, 128>}, {transform_indices = @transform_8, window_bounds = array<i64: 2, 128>}, {transform_indices = @transform_9, window_bounds = array<i64: 2, 128>}, {transform_indices = @transform_10, window_bounds = array<i64: 2, 128>}, {transform_indices = @transform_11, window_bounds = array<i64: 2, 128>}, {transform_indices = @transform_12, window_bounds = array<i64: 2, 128>}]} {
    %c0_i32 = arith.constant 0 : i32
    %0 = arith.cmpi eq, %arg1, %c0_i32 : i32
    %1 = arith.extui %0 : i1 to i32
    %c0_i32_0 = arith.constant 0 : i32
    %2 = arith.cmpi ne, %1, %c0_i32_0 : i32
    scf.if %2 {
      %cst_45 = arith.constant 0.000000e+00 : f32
      %55 = vector.broadcast %cst_45 : f32 to vector<2x512xf32>
      %c0_46 = arith.constant 0 : index
      %c0_47 = arith.constant 0 : index
      %56 = vector.load %arg15[%c0_46, %c0_47] : memref<2x512xf32, #tpu.memory_space<vmem>>, vector<2x512xf32>
      tpu.vector_store %arg15[%c0_46, %c0_47], %55 {strides = array<i32>} : memref<2x512xf32, #tpu.memory_space<vmem>>, vector<2x512xf32>,
      %cst_48 = arith.constant 0.000000e+00 : f32
      %57 = vector.broadcast %cst_48 : f32 to vector<2x512xf32>
      %c0_49 = arith.constant 0 : index
      %c0_50 = arith.constant 0 : index
      %58 = vector.load %arg16[%c0_49, %c0_50] : memref<2x512xf32, #tpu.memory_space<vmem>>, vector<2x512xf32>
      tpu.vector_store %arg16[%c0_49, %c0_50], %57 {strides = array<i32>} : memref<2x512xf32, #tpu.memory_space<vmem>>, vector<2x512xf32>,
      %cst_51 = arith.constant 0.000000e+00 : f32
      %59 = vector.broadcast %cst_51 : f32 to vector<2x512xf32>
      %c0_52 = arith.constant 0 : index
      %c0_53 = arith.constant 0 : index
      %60 = vector.load %arg17[%c0_52, %c0_53] : memref<2x512xf32, #tpu.memory_space<vmem>>, vector<2x512xf32>
      tpu.vector_store %arg17[%c0_52, %c0_53], %59 {strides = array<i32>} : memref<2x512xf32, #tpu.memory_space<vmem>>, vector<2x512xf32>,
      %cst_54 = arith.constant 0.000000e+00 : f32
      %61 = vector.broadcast %cst_54 : f32 to vector<2x512xf32>
      %c0_55 = arith.constant 0 : index
      %c0_56 = arith.constant 0 : index
      %62 = vector.load %arg18[%c0_55, %c0_56] : memref<2x512xf32, #tpu.memory_space<vmem>>, vector<2x512xf32>
      tpu.vector_store %arg18[%c0_55, %c0_56], %61 {strides = array<i32>} : memref<2x512xf32, #tpu.memory_space<vmem>>, vector<2x512xf32>,
      %cst_57 = arith.constant 0.000000e+00 : f32
      %63 = vector.broadcast %cst_57 : f32 to vector<2x512xf32>
      %c0_58 = arith.constant 0 : index
      %c0_59 = arith.constant 0 : index
      %64 = vector.load %arg19[%c0_58, %c0_59] : memref<2x512xf32, #tpu.memory_space<vmem>>, vector<2x512xf32>
      tpu.vector_store %arg19[%c0_58, %c0_59], %63 {strides = array<i32>} : memref<2x512xf32, #tpu.memory_space<vmem>>, vector<2x512xf32>,
      %cst_60 = arith.constant 0.000000e+00 : f32
      %65 = vector.broadcast %cst_60 : f32 to vector<2x512xf32>
      %c0_61 = arith.constant 0 : index
      %c0_62 = arith.constant 0 : index
      %66 = vector.load %arg20[%c0_61, %c0_62] : memref<2x512xf32, #tpu.memory_space<vmem>>, vector<2x512xf32>
      tpu.vector_store %arg20[%c0_61, %c0_62], %65 {strides = array<i32>} : memref<2x512xf32, #tpu.memory_space<vmem>>, vector<2x512xf32>,
    } else {
    }
    %c0 = arith.constant 0 : index
    %c0_1 = arith.constant 0 : index
    %3 = vector.load %arg6[%c0, %c0_1] : memref<2x512xf32, #tpu.memory_space<vmem>>, vector<2x512xf32>
    %c0_2 = arith.constant 0 : index
    %c0_3 = arith.constant 0 : index
    %4 = vector.load %arg2[%c0_2, %c0_3] : memref<2x512xf32, #tpu.memory_space<vmem>>, vector<2x512xf32>
    %c0_4 = arith.constant 0 : index
    %c0_5 = arith.constant 0 : index
    %5 = vector.load %arg4[%c0_4, %c0_5] : memref<2x512xf32, #tpu.memory_space<vmem>>, vector<2x512xf32>
    %6 = arith.subf %5, %4 : vector<2x512xf32>
    %7 = arith.mulf %6, %6 : vector<2x512xf32>
    %8 = arith.mulf %7, %3 : vector<2x512xf32>
    %cst = arith.constant 1.000000e-01 : f32
    %9 = vector.broadcast %cst : f32 to vector<2x512xf32>
    %10 = arith.cmpf oge, %4, %9 : vector<2x512xf32>
    %11 = arith.extui %10 : vector<2x512xi1> to vector<2x512xi32>
    %12 = arith.sitofp %11 : vector<2x512xi32> to vector<2x512xf32>
    %c0_6 = arith.constant 0 : index
    %c0_7 = arith.constant 0 : index
    %13 = vector.load %arg15[%c0_6, %c0_7] : memref<2x512xf32, #tpu.memory_space<vmem>>, vector<2x512xf32>
    %14 = arith.addf %13, %12 : vector<2x512xf32>
    %c0_8 = arith.constant 0 : index
    %c0_9 = arith.constant 0 : index
    %15 = vector.load %arg15[%c0_8, %c0_9] : memref<2x512xf32, #tpu.memory_space<vmem>>, vector<2x512xf32>
    tpu.vector_store %arg15[%c0_8, %c0_9], %14 {strides = array<i32>} : memref<2x512xf32, #tpu.memory_space<vmem>>, vector<2x512xf32>,
    %c0_10 = arith.constant 0 : index
    %c0_11 = arith.constant 0 : index
    %16 = vector.load %arg16[%c0_10, %c0_11] : memref<2x512xf32, #tpu.memory_space<vmem>>, vector<2x512xf32>
    %17 = arith.mulf %8, %12 : vector<2x512xf32>
    %18 = arith.addf %16, %17 : vector<2x512xf32>
    %c0_12 = arith.constant 0 : index
    %c0_13 = arith.constant 0 : index
    %19 = vector.load %arg16[%c0_12, %c0_13] : memref<2x512xf32, #tpu.memory_space<vmem>>, vector<2x512xf32>
    tpu.vector_store %arg16[%c0_12, %c0_13], %18 {strides = array<i32>} : memref<2x512xf32, #tpu.memory_space<vmem>>, vector<2x512xf32>,
    %c0_14 = arith.constant 0 : index
    %c0_15 = arith.constant 0 : index
    %20 = vector.load %arg17[%c0_14, %c0_15] : memref<2x512xf32, #tpu.memory_space<vmem>>, vector<2x512xf32>
    %cst_16 = arith.constant 0.000000e+00 : f32
    %21 = vector.broadcast %cst_16 : f32 to vector<2x512xf32>
    %22 = arith.select %10, %21, %8 : vector<2x512xi1>, vector<2x512xf32>
    %23 = arith.addf %20, %22 : vector<2x512xf32>
    %c0_17 = arith.constant 0 : index
    %c0_18 = arith.constant 0 : index
    %24 = vector.load %arg17[%c0_17, %c0_18] : memref<2x512xf32, #tpu.memory_space<vmem>>, vector<2x512xf32>
    tpu.vector_store %arg17[%c0_17, %c0_18], %23 {strides = array<i32>} : memref<2x512xf32, #tpu.memory_space<vmem>>, vector<2x512xf32>,
    %cst_19 = arith.constant -1.000000e+00 : f32
    %25 = vector.broadcast %cst_19 : f32 to vector<2x512xf32>
    %26 = arith.select %10, %25, %8 : vector<2x512xi1>, vector<2x512xf32>
    %c0_20 = arith.constant 0 : index
    %c0_21 = arith.constant 0 : index
    %27 = vector.load %arg7[%c0_20, %c0_21] : memref<2x512xf32, #tpu.memory_space<vmem>>, vector<2x512xf32>
    tpu.vector_store %arg7[%c0_20, %c0_21], %26 {strides = array<i32>} : memref<2x512xf32, #tpu.memory_space<vmem>>, vector<2x512xf32>,
    %c0_22 = arith.constant 0 : index
    %c0_23 = arith.constant 0 : index
    %28 = vector.load %arg3[%c0_22, %c0_23] : memref<2x512xf32, #tpu.memory_space<vmem>>, vector<2x512xf32>
    %c0_24 = arith.constant 0 : index
    %c0_25 = arith.constant 0 : index
    %29 = vector.load %arg5[%c0_24, %c0_25] : memref<2x512xf32, #tpu.memory_space<vmem>>, vector<2x512xf32>
    %30 = arith.subf %29, %28 : vector<2x512xf32>
    %31 = arith.mulf %30, %30 : vector<2x512xf32>
    %32 = arith.mulf %31, %3 : vector<2x512xf32>
    %cst_26 = arith.constant 1.000000e-01 : f32
    %33 = vector.broadcast %cst_26 : f32 to vector<2x512xf32>
    %34 = arith.cmpf oge, %28, %33 : vector<2x512xf32>
    %35 = arith.extui %34 : vector<2x512xi1> to vector<2x512xi32>
    %36 = arith.sitofp %35 : vector<2x512xi32> to vector<2x512xf32>
    %c0_27 = arith.constant 0 : index
    %c0_28 = arith.constant 0 : index
    %37 = vector.load %arg18[%c0_27, %c0_28] : memref<2x512xf32, #tpu.memory_space<vmem>>, vector<2x512xf32>
    %38 = arith.addf %37, %36 : vector<2x512xf32>
    %c0_29 = arith.constant 0 : index
    %c0_30 = arith.constant 0 : index
    %39 = vector.load %arg18[%c0_29, %c0_30] : memref<2x512xf32, #tpu.memory_space<vmem>>, vector<2x512xf32>
    tpu.vector_store %arg18[%c0_29, %c0_30], %38 {strides = array<i32>} : memref<2x512xf32, #tpu.memory_space<vmem>>, vector<2x512xf32>,
    %c0_31 = arith.constant 0 : index
    %c0_32 = arith.constant 0 : index
    %40 = vector.load %arg19[%c0_31, %c0_32] : memref<2x512xf32, #tpu.memory_space<vmem>>, vector<2x512xf32>
    %41 = arith.mulf %32, %36 : vector<2x512xf32>
    %42 = arith.addf %40, %41 : vector<2x512xf32>
    %c0_33 = arith.constant 0 : index
    %c0_34 = arith.constant 0 : index
    %43 = vector.load %arg19[%c0_33, %c0_34] : memref<2x512xf32, #tpu.memory_space<vmem>>, vector<2x512xf32>
    tpu.vector_store %arg19[%c0_33, %c0_34], %42 {strides = array<i32>} : memref<2x512xf32, #tpu.memory_space<vmem>>, vector<2x512xf32>,
    %c0_35 = arith.constant 0 : index
    %c0_36 = arith.constant 0 : index
    %44 = vector.load %arg20[%c0_35, %c0_36] : memref<2x512xf32, #tpu.memory_space<vmem>>, vector<2x512xf32>
    %cst_37 = arith.constant 0.000000e+00 : f32
    %45 = vector.broadcast %cst_37 : f32 to vector<2x512xf32>
    %46 = arith.select %34, %45, %32 : vector<2x512xi1>, vector<2x512xf32>
    %47 = arith.addf %44, %46 : vector<2x512xf32>
    %c0_38 = arith.constant 0 : index
    %c0_39 = arith.constant 0 : index
    %48 = vector.load %arg20[%c0_38, %c0_39] : memref<2x512xf32, #tpu.memory_space<vmem>>, vector<2x512xf32>
    tpu.vector_store %arg20[%c0_38, %c0_39], %47 {strides = array<i32>} : memref<2x512xf32, #tpu.memory_space<vmem>>, vector<2x512xf32>,
    %cst_40 = arith.constant -1.000000e+00 : f32
    %49 = vector.broadcast %cst_40 : f32 to vector<2x512xf32>
    %50 = arith.select %34, %49, %32 : vector<2x512xi1>, vector<2x512xf32>
    %c0_41 = arith.constant 0 : index
    %c0_42 = arith.constant 0 : index
    %51 = vector.load %arg8[%c0_41, %c0_42] : memref<2x512xf32, #tpu.memory_space<vmem>>, vector<2x512xf32>
    tpu.vector_store %arg8[%c0_41, %c0_42], %50 {strides = array<i32>} : memref<2x512xf32, #tpu.memory_space<vmem>>, vector<2x512xf32>,
    %c0_i32_43 = arith.constant 0 : i32
    %52 = arith.cmpi eq, %arg1, %c0_i32_43 : i32
    %53 = arith.extui %52 : i1 to i32
    %c0_i32_44 = arith.constant 0 : i32
    %54 = arith.cmpi ne, %53, %c0_i32_44 : i32
    scf.if %54 {
      %c0_45 = arith.constant 0 : index
      %c0_46 = arith.constant 0 : index
      %55 = vector.load %arg15[%c0_45, %c0_46] : memref<2x512xf32, #tpu.memory_space<vmem>>, vector<2x512xf32>
      %cst_47 = arith.constant dense<0.000000e+00> : vector<2xf32>
      %56 = vector.multi_reduction <add>, %55, %cst_47 [1] : vector<2x512xf32> to vector<2xf32>
      %57 = vector.shape_cast %56 : vector<2xf32> to vector<2x1xf32>
      %58 = vector.shape_cast %57 : vector<2x1xf32> to vector<2x1xf32>
      %59 = vector.broadcast %58 : vector<2x1xf32> to vector<2x128xf32>
      %c0_48 = arith.constant 0 : index
      %c0_49 = arith.constant 0 : index
      %60 = vector.load %arg9[%c0_48, %c0_49] : memref<2x128xf32, #tpu.memory_space<vmem>>, vector<2x128xf32>
      tpu.vector_store %arg9[%c0_48, %c0_49], %59 {strides = array<i32>} : memref<2x128xf32, #tpu.memory_space<vmem>>, vector<2x128xf32>,
      %c0_50 = arith.constant 0 : index
      %c0_51 = arith.constant 0 : index
      %61 = vector.load %arg16[%c0_50, %c0_51] : memref<2x512xf32, #tpu.memory_space<vmem>>, vector<2x512xf32>
      %cst_52 = arith.constant dense<0.000000e+00> : vector<2xf32>
      %62 = vector.multi_reduction <add>, %61, %cst_52 [1] : vector<2x512xf32> to vector<2xf32>
      %63 = vector.shape_cast %62 : vector<2xf32> to vector<2x1xf32>
      %64 = vector.shape_cast %63 : vector<2x1xf32> to vector<2x1xf32>
      %65 = vector.broadcast %64 : vector<2x1xf32> to vector<2x128xf32>
      %c0_53 = arith.constant 0 : index
      %c0_54 = arith.constant 0 : index
      %66 = vector.load %arg10[%c0_53, %c0_54] : memref<2x128xf32, #tpu.memory_space<vmem>>, vector<2x128xf32>
      tpu.vector_store %arg10[%c0_53, %c0_54], %65 {strides = array<i32>} : memref<2x128xf32, #tpu.memory_space<vmem>>, vector<2x128xf32>,
      %c0_55 = arith.constant 0 : index
      %c0_56 = arith.constant 0 : index
      %67 = vector.load %arg17[%c0_55, %c0_56] : memref<2x512xf32, #tpu.memory_space<vmem>>, vector<2x512xf32>
      %cst_57 = arith.constant dense<0.000000e+00> : vector<2xf32>
      %68 = vector.multi_reduction <add>, %67, %cst_57 [1] : vector<2x512xf32> to vector<2xf32>
      %69 = vector.shape_cast %68 : vector<2xf32> to vector<2x1xf32>
      %70 = vector.shape_cast %69 : vector<2x1xf32> to vector<2x1xf32>
      %71 = vector.broadcast %70 : vector<2x1xf32> to vector<2x128xf32>
      %c0_58 = arith.constant 0 : index
      %c0_59 = arith.constant 0 : index
      %72 = vector.load %arg11[%c0_58, %c0_59] : memref<2x128xf32, #tpu.memory_space<vmem>>, vector<2x128xf32>
      tpu.vector_store %arg11[%c0_58, %c0_59], %71 {strides = array<i32>} : memref<2x128xf32, #tpu.memory_space<vmem>>, vector<2x128xf32>,
      %c0_60 = arith.constant 0 : index
      %c0_61 = arith.constant 0 : index
      %73 = vector.load %arg18[%c0_60, %c0_61] : memref<2x512xf32, #tpu.memory_space<vmem>>, vector<2x512xf32>
      %cst_62 = arith.constant dense<0.000000e+00> : vector<2xf32>
      %74 = vector.multi_reduction <add>, %73, %cst_62 [1] : vector<2x512xf32> to vector<2xf32>
      %75 = vector.shape_cast %74 : vector<2xf32> to vector<2x1xf32>
      %76 = vector.shape_cast %75 : vector<2x1xf32> to vector<2x1xf32>
      %77 = vector.broadcast %76 : vector<2x1xf32> to vector<2x128xf32>
      %c0_63 = arith.constant 0 : index
      %c0_64 = arith.constant 0 : index
      %78 = vector.load %arg12[%c0_63, %c0_64] : memref<2x128xf32, #tpu.memory_space<vmem>>, vector<2x128xf32>
      tpu.vector_store %arg12[%c0_63, %c0_64], %77 {strides = array<i32>} : memref<2x128xf32, #tpu.memory_space<vmem>>, vector<2x128xf32>,
      %c0_65 = arith.constant 0 : index
      %c0_66 = arith.constant 0 : index
      %79 = vector.load %arg19[%c0_65, %c0_66] : memref<2x512xf32, #tpu.memory_space<vmem>>, vector<2x512xf32>
      %cst_67 = arith.constant dense<0.000000e+00> : vector<2xf32>
      %80 = vector.multi_reduction <add>, %79, %cst_67 [1] : vector<2x512xf32> to vector<2xf32>
      %81 = vector.shape_cast %80 : vector<2xf32> to vector<2x1xf32>
      %82 = vector.shape_cast %81 : vector<2x1xf32> to vector<2x1xf32>
      %83 = vector.broadcast %82 : vector<2x1xf32> to vector<2x128xf32>
      %c0_68 = arith.constant 0 : index
      %c0_69 = arith.constant 0 : index
      %84 = vector.load %arg13[%c0_68, %c0_69] : memref<2x128xf32, #tpu.memory_space<vmem>>, vector<2x128xf32>
      tpu.vector_store %arg13[%c0_68, %c0_69], %83 {strides = array<i32>} : memref<2x128xf32, #tpu.memory_space<vmem>>, vector<2x128xf32>,
      %c0_70 = arith.constant 0 : index
      %c0_71 = arith.constant 0 : index
      %85 = vector.load %arg20[%c0_70, %c0_71] : memref<2x512xf32, #tpu.memory_space<vmem>>, vector<2x512xf32>
      %cst_72 = arith.constant dense<0.000000e+00> : vector<2xf32>
      %86 = vector.multi_reduction <add>, %85, %cst_72 [1] : vector<2x512xf32> to vector<2xf32>
      %87 = vector.shape_cast %86 : vector<2xf32> to vector<2x1xf32>
      %88 = vector.shape_cast %87 : vector<2x1xf32> to vector<2x1xf32>
      %89 = vector.broadcast %88 : vector<2x1xf32> to vector<2x128xf32>
      %c0_73 = arith.constant 0 : index
      %c0_74 = arith.constant 0 : index
      %90 = vector.load %arg14[%c0_73, %c0_74] : memref<2x128xf32, #tpu.memory_space<vmem>>, vector<2x128xf32>
      tpu.vector_store %arg14[%c0_73, %c0_74], %89 {strides = array<i32>} : memref<2x128xf32, #tpu.memory_space<vmem>>, vector<2x128xf32>,
    } else {
    }
    return
  }
  func.func @transform_0(%arg0: i32, %arg1: i32) -> (i32, i32) {
    %c0_i32 = arith.constant 0 : i32
    return %arg0, %arg1 : i32, i32
  }
  func.func @transform_1(%arg0: i32, %arg1: i32) -> (i32, i32) {
    %c0_i32 = arith.constant 0 : i32
    return %arg0, %arg1 : i32, i32
  }
  func.func @transform_2(%arg0: i32, %arg1: i32) -> (i32, i32) {
    %c0_i32 = arith.constant 0 : i32
    return %arg0, %arg1 : i32, i32
  }
  func.func @transform_3(%arg0: i32, %arg1: i32) -> (i32, i32) {
    %c0_i32 = arith.constant 0 : i32
    return %arg0, %arg1 : i32, i32
  }
  func.func @transform_4(%arg0: i32, %arg1: i32) -> (i32, i32) {
    %c0_i32 = arith.constant 0 : i32
    return %arg0, %arg1 : i32, i32
  }
  func.func @transform_5(%arg0: i32, %arg1: i32) -> (i32, i32) {
    %c0_i32 = arith.constant 0 : i32
    return %arg0, %arg1 : i32, i32
  }
  func.func @transform_6(%arg0: i32, %arg1: i32) -> (i32, i32) {
    %c0_i32 = arith.constant 0 : i32
    return %arg0, %arg1 : i32, i32
  }
  func.func @transform_7(%arg0: i32, %arg1: i32) -> (i32, i32) {
    %c0_i32 = arith.constant 0 : i32
    %c0_i32_0 = arith.constant 0 : i32
    return %arg0, %c0_i32 : i32, i32
  }
  func.func @transform_8(%arg0: i32, %arg1: i32) -> (i32, i32) {
    %c0_i32 = arith.constant 0 : i32
    %c0_i32_0 = arith.constant 0 : i32
    return %arg0, %c0_i32 : i32, i32
  }
  func.func @transform_9(%arg0: i32, %arg1: i32) -> (i32, i32) {
    %c0_i32 = arith.constant 0 : i32
    %c0_i32_0 = arith.constant 0 : i32
    return %arg0, %c0_i32 : i32, i32
  }
  func.func @transform_10(%arg0: i32, %arg1: i32) -> (i32, i32) {
    %c0_i32 = arith.constant 0 : i32
    %c0_i32_0 = arith.constant 0 : i32
    return %arg0, %c0_i32 : i32, i32
  }
  func.func @transform_11(%arg0: i32, %arg1: i32) -> (i32, i32) {
    %c0_i32 = arith.constant 0 : i32
    %c0_i32_0 = arith.constant 0 : i32
    return %arg0, %c0_i32 : i32, i32
  }
  func.func @transform_12(%arg0: i32, %arg1: i32) -> (i32, i32) {
    %c0_i32 = arith.constant 0 : i32
    %c0_i32_0 = arith.constant 0 : i32
    return %arg0, %c0_i32 : i32, i32
  }
}

module attributes {stable_mosaic.version = 11 : i64} {
  func.func @_ohem_kernel(%arg0: i32, %arg1: i32, %arg2: memref<1xi32, #tpu.memory_space<smem>>, %arg3: memref<2x512xf32, #tpu.memory_space<vmem>>, %arg4: memref<2x128xf32, #tpu.memory_space<vmem>>, %arg5: memref<2x128xf32, #tpu.memory_space<vmem>>, %arg6: memref<2x128xf32, #tpu.memory_space<vmem>>, %arg7: memref<2x128xf32, #tpu.memory_space<vmem>>, %arg8: memref<2x512xf32, #tpu.memory_space<vmem>>, %arg9: memref<2x512xf32, #tpu.memory_space<vmem>>) attributes {dimension_semantics = [#tpu.dimension_semantics<parallel>, #tpu.dimension_semantics<arbitrary>], iteration_bounds = array<i64: 1, 1>, scalar_prefetch = 1 : i64, scratch_operands = 2 : i64, tpu.core_type = #tpu.core_type<tc>, window_params = [{transform_indices = @transform_0, window_bounds = array<i64: 2, 512>}, {transform_indices = @transform_1, window_bounds = array<i64: 2, 128>}, {transform_indices = @transform_2, window_bounds = array<i64: 2, 128>}, {transform_indices = @transform_3, window_bounds = array<i64: 2, 128>}, {transform_indices = @transform_4, window_bounds = array<i64: 2, 128>}]} {
    %c0_i32 = arith.constant 0 : i32
    %0 = arith.cmpi eq, %arg1, %c0_i32 : i32
    %1 = arith.extui %0 : i1 to i32
    %c0_i32_0 = arith.constant 0 : i32
    %2 = arith.cmpi ne, %1, %c0_i32_0 : i32
    scf.if %2 {
      %cst = arith.constant 0.000000e+00 : f32
      %17 = vector.broadcast %cst : f32 to vector<2x512xf32>
      %c0_5 = arith.constant 0 : index
      %c0_6 = arith.constant 0 : index
      %18 = vector.load %arg8[%c0_5, %c0_6] : memref<2x512xf32, #tpu.memory_space<vmem>>, vector<2x512xf32>
      tpu.vector_store %arg8[%c0_5, %c0_6], %17 {strides = array<i32>} : memref<2x512xf32, #tpu.memory_space<vmem>>, vector<2x512xf32>,
      %cst_7 = arith.constant 0.000000e+00 : f32
      %19 = vector.broadcast %cst_7 : f32 to vector<2x512xf32>
      %c0_8 = arith.constant 0 : index
      %c0_9 = arith.constant 0 : index
      %20 = vector.load %arg9[%c0_8, %c0_9] : memref<2x512xf32, #tpu.memory_space<vmem>>, vector<2x512xf32>
      tpu.vector_store %arg9[%c0_8, %c0_9], %19 {strides = array<i32>} : memref<2x512xf32, #tpu.memory_space<vmem>>, vector<2x512xf32>,
    } else {
    }
    %c0 = arith.constant 0 : index
    %c0_1 = arith.constant 0 : index
    %3 = vector.load %arg4[%c0, %c0_1] : memref<2x128xf32, #tpu.memory_space<vmem>>, vector<2x1xf32>
    %4 = arith.fptosi %3 : vector<2x1xf32> to vector<2x1xi32>
    %c3_i32 = arith.constant 3 : i32
    %5 = vector.broadcast %c3_i32 : i32 to vector<2x1xi32>
    %6 = arith.muli %5, %4 : vector<2x1xi32>
    %c512_i32 = arith.constant 512 : i32
    %7 = vector.broadcast %c512_i32 : i32 to vector<2x1xi32>
    %8 = arith.subi %7, %6 : vector<2x1xi32>
    %9 = arith.index_cast %arg0 : i32 to index
    %10 = memref.load %arg2[%9] : memref<1xi32, #tpu.memory_space<smem>>
    %11 = arith.cmpi sge, %arg1, %10 : i32
    %12 = arith.extui %11 : i1 to i32
    %c0_i32_2 = arith.constant 0 : i32
    %13 = arith.cmpi ne, %12, %c0_i32_2 : i32
    scf.if %13 {
      %c0_5 = arith.constant 0 : index
      %c0_6 = arith.constant 0 : index
      %17 = vector.load %arg3[%c0_5, %c0_6] : memref<2x512xf32, #tpu.memory_space<vmem>>, vector<2x512xf32>
      %18 = tpu.iota {dimensions = array<i32: 1>} : vector<2x512xi32>
      %c512_i32_7 = arith.constant 512 : i32
      %19 = arith.muli %arg1, %c512_i32_7 : i32
      %20 = vector.broadcast %19 : i32 to vector<2x512xi32>
      %21 = arith.addi %18, %20 : vector<2x512xi32>
      %c0_8 = arith.constant 0 : index
      %c0_9 = arith.constant 0 : index
      %22 = vector.load %arg8[%c0_8, %c0_9] : memref<2x512xf32, #tpu.memory_space<vmem>>, vector<2x512xf32>
      %23 = vector.broadcast %8 : vector<2x1xi32> to vector<2x512xi32>
      %24 = arith.cmpi sge, %21, %23 : vector<2x512xi32>
      %cst = arith.constant 0.000000e+00 : f32
      %25 = vector.broadcast %cst : f32 to vector<2x512xf32>
      %26 = arith.select %24, %17, %25 : vector<2x512xi1>, vector<2x512xf32>
      %27 = arith.addf %22, %26 : vector<2x512xf32>
      %c0_10 = arith.constant 0 : index
      %c0_11 = arith.constant 0 : index
      %28 = vector.load %arg8[%c0_10, %c0_11] : memref<2x512xf32, #tpu.memory_space<vmem>>, vector<2x512xf32>
      tpu.vector_store %arg8[%c0_10, %c0_11], %27 {strides = array<i32>} : memref<2x512xf32, #tpu.memory_space<vmem>>, vector<2x512xf32>,
      %c0_12 = arith.constant 0 : index
      %c0_13 = arith.constant 0 : index
      %29 = vector.load %arg9[%c0_12, %c0_13] : memref<2x512xf32, #tpu.memory_space<vmem>>, vector<2x512xf32>
      %c12_i32 = arith.constant 12 : i32
      %30 = vector.broadcast %c12_i32 : i32 to vector<2x512xi32>
      %31 = arith.cmpi sge, %21, %30 : vector<2x512xi32>
      %cst_14 = arith.constant 0.000000e+00 : f32
      %32 = vector.broadcast %cst_14 : f32 to vector<2x512xf32>
      %33 = arith.select %31, %17, %32 : vector<2x512xi1>, vector<2x512xf32>
      %34 = arith.addf %29, %33 : vector<2x512xf32>
      %c0_15 = arith.constant 0 : index
      %c0_16 = arith.constant 0 : index
      %35 = vector.load %arg9[%c0_15, %c0_16] : memref<2x512xf32, #tpu.memory_space<vmem>>, vector<2x512xf32>
      tpu.vector_store %arg9[%c0_15, %c0_16], %34 {strides = array<i32>} : memref<2x512xf32, #tpu.memory_space<vmem>>, vector<2x512xf32>,
    } else {
    }
    %c0_i32_3 = arith.constant 0 : i32
    %14 = arith.cmpi eq, %arg1, %c0_i32_3 : i32
    %15 = arith.extui %14 : i1 to i32
    %c0_i32_4 = arith.constant 0 : i32
    %16 = arith.cmpi ne, %15, %c0_i32_4 : i32
    scf.if %16 {
      %c0_5 = arith.constant 0 : index
      %c0_6 = arith.constant 0 : index
      %17 = vector.load %arg5[%c0_5, %c0_6] : memref<2x128xf32, #tpu.memory_space<vmem>>, vector<2x1xf32>
      %c0_7 = arith.constant 0 : index
      %c0_8 = arith.constant 0 : index
      %18 = vector.load %arg6[%c0_7, %c0_8] : memref<2x128xf32, #tpu.memory_space<vmem>>, vector<2x1xf32>
      %cst = arith.constant 5.120000e+02 : f32
      %19 = vector.broadcast %cst : f32 to vector<2x1xf32>
      %20 = arith.subf %19, %3 : vector<2x1xf32>
      %cst_9 = arith.constant 3.000000e+00 : f32
      %21 = vector.broadcast %cst_9 : f32 to vector<2x1xf32>
      %22 = arith.mulf %21, %3 : vector<2x1xf32>
      %cst_10 = arith.constant 1.000000e+00 : f32
      %23 = vector.broadcast %cst_10 : f32 to vector<2x1xf32>
      %24 = arith.maximumf %3, %23 : vector<2x1xf32>
      %25 = arith.divf %17, %24 : vector<2x1xf32>
      %cst_11 = arith.constant 1.000000e+00 : f32
      %26 = vector.broadcast %cst_11 : f32 to vector<2x1xf32>
      %27 = arith.maximumf %20, %26 : vector<2x1xf32>
      %28 = arith.divf %18, %27 : vector<2x1xf32>
      %c0_12 = arith.constant 0 : index
      %c0_13 = arith.constant 0 : index
      %29 = vector.load %arg8[%c0_12, %c0_13] : memref<2x512xf32, #tpu.memory_space<vmem>>, vector<2x512xf32>
      %cst_14 = arith.constant dense<0.000000e+00> : vector<2xf32>
      %30 = vector.multi_reduction <add>, %29, %cst_14 [1] : vector<2x512xf32> to vector<2xf32>
      %31 = vector.shape_cast %30 : vector<2xf32> to vector<2x1xf32>
      %cst_15 = arith.constant 1.000000e+00 : f32
      %32 = vector.broadcast %cst_15 : f32 to vector<2x1xf32>
      %33 = arith.maximumf %22, %32 : vector<2x1xf32>
      %34 = arith.divf %31, %33 : vector<2x1xf32>
      %35 = arith.cmpf olt, %20, %22 : vector<2x1xf32>
      %36 = arith.select %35, %28, %34 : vector<2x1xi1>, vector<2x1xf32>
      %c0_16 = arith.constant 0 : index
      %c0_17 = arith.constant 0 : index
      %37 = vector.load %arg9[%c0_16, %c0_17] : memref<2x512xf32, #tpu.memory_space<vmem>>, vector<2x512xf32>
      %cst_18 = arith.constant dense<0.000000e+00> : vector<2xf32>
      %38 = vector.multi_reduction <add>, %37, %cst_18 [1] : vector<2x512xf32> to vector<2xf32>
      %39 = vector.shape_cast %38 : vector<2xf32> to vector<2x1xf32>
      %cst_19 = arith.constant 5.000000e+02 : f32
      %40 = vector.broadcast %cst_19 : f32 to vector<2x1xf32>
      %41 = arith.divf %39, %40 : vector<2x1xf32>
      %cst_20 = arith.constant 0.000000e+00 : f32
      %42 = vector.broadcast %cst_20 : f32 to vector<2x1xf32>
      %43 = arith.cmpf ogt, %3, %42 : vector<2x1xf32>
      %44 = arith.addf %25, %36 : vector<2x1xf32>
      %45 = arith.select %43, %44, %41 : vector<2x1xi1>, vector<2x1xf32>
      %46 = vector.shape_cast %45 : vector<2x1xf32> to vector<2x1xf32>
      %47 = vector.broadcast %46 : vector<2x1xf32> to vector<2x128xf32>
      %c0_21 = arith.constant 0 : index
      %c0_22 = arith.constant 0 : index
      %48 = vector.load %arg7[%c0_21, %c0_22] : memref<2x128xf32, #tpu.memory_space<vmem>>, vector<2x128xf32>
      tpu.vector_store %arg7[%c0_21, %c0_22], %47 {strides = array<i32>} : memref<2x128xf32, #tpu.memory_space<vmem>>, vector<2x128xf32>,
    } else {
    }
    return
  }
  func.func @transform_0(%arg0: i32, %arg1: i32, %arg2: memref<1xi32, #tpu.memory_space<smem>>) -> (i32, i32) {
    %0 = arith.index_cast %arg0 : i32 to index
    %1 = memref.load %arg2[%0] : memref<1xi32, #tpu.memory_space<smem>>
    %2 = arith.maxsi %arg1, %1 : i32
    %c0_i32 = arith.constant 0 : i32
    return %arg0, %2 : i32, i32
  }
  func.func @transform_1(%arg0: i32, %arg1: i32, %arg2: memref<1xi32, #tpu.memory_space<smem>>) -> (i32, i32) {
    %c0_i32 = arith.constant 0 : i32
    %c0_i32_0 = arith.constant 0 : i32
    return %arg0, %c0_i32 : i32, i32
  }
  func.func @transform_2(%arg0: i32, %arg1: i32, %arg2: memref<1xi32, #tpu.memory_space<smem>>) -> (i32, i32) {
    %c0_i32 = arith.constant 0 : i32
    %c0_i32_0 = arith.constant 0 : i32
    return %arg0, %c0_i32 : i32, i32
  }
  func.func @transform_3(%arg0: i32, %arg1: i32, %arg2: memref<1xi32, #tpu.memory_space<smem>>) -> (i32, i32) {
    %c0_i32 = arith.constant 0 : i32
    %c0_i32_0 = arith.constant 0 : i32
    return %arg0, %c0_i32 : i32, i32
  }
  func.func @transform_4(%arg0: i32, %arg1: i32, %arg2: memref<1xi32, #tpu.memory_space<smem>>) -> (i32, i32) {
    %c0_i32 = arith.constant 0 : i32
    %c0_i32_0 = arith.constant 0 : i32
    return %arg0, %c0_i32 : i32, i32
  }
}

</mosaic_0001>

<llo_original>
// kernel: craft_loss.3
$region0: #{craft_loss.3}
  #allocation0 [shape = 'u32[]', space=smem, size = 0x4, offset = 0x4, fixed_abs, tag = 'smem constant byte address 0x4 - core index']
  #allocation1 [shape = 'u32[72,128]{1,0:T(1,128)}', space=vmem, size = 0x9000, scoped, tag = 'internal scratch']
  #allocation2 [shape = 'f32[2,512]{1,0:T(2,128)}', space=vmem, size = 0x1000, scoped, tag = 'scratch operand']
  #allocation3 [shape = 'f32[2,512]{1,0:T(2,128)}', space=vmem, size = 0x1000, scoped, tag = 'scratch operand']
  #allocation4 [shape = 'f32[2,512]{1,0:T(2,128)}', space=vmem, size = 0x1000, scoped, tag = 'scratch operand']
  #allocation5 [shape = 'f32[2,512]{1,0:T(2,128)}', space=vmem, size = 0x1000, scoped, tag = 'scratch operand']
  #allocation6 [shape = 'f32[2,512]{1,0:T(2,128)}', space=vmem, size = 0x1000, scoped, tag = 'scratch operand']
  #allocation7 [shape = 'f32[2,512]{1,0:T(2,128)}', space=vmem, size = 0x1000, scoped, tag = 'scratch operand']
  %s0 = inlined_call_operand.vmem [shape: f32[2,512], index: 0, kind: input, shape index: {}]
  %s1 = inlined_call_operand.vmem [shape: f32[2,512], index: 1, kind: input, shape index: {}]
  %s2 = inlined_call_operand.vmem [shape: f32[2,512], index: 2, kind: input, shape index: {}]
  %s3 = inlined_call_operand.vmem [shape: f32[2,512], index: 3, kind: input, shape index: {}]
  %s4 = inlined_call_operand.vmem [shape: f32[2,512], index: 4, kind: input, shape index: {}]
  %s5 = inlined_call_operand.vmem [shape: f32[2,512], index: 5, kind: output, shape index: {0}]
  %s6 = inlined_call_operand.vmem [shape: f32[2,512], index: 6, kind: output, shape index: {1}]
  %s7 = inlined_call_operand.vmem [shape: f32[2,128], index: 7, kind: output, shape index: {2}]
  %s8 = inlined_call_operand.vmem [shape: f32[2,128], index: 8, kind: output, shape index: {3}]
  %s9 = inlined_call_operand.vmem [shape: f32[2,128], index: 9, kind: output, shape index: {4}]
  %s10 = inlined_call_operand.vmem [shape: f32[2,128], index: 10, kind: output, shape index: {5}]
  %s11 = inlined_call_operand.vmem [shape: f32[2,128], index: 11, kind: output, shape index: {6}]
  %s12 = inlined_call_operand.vmem [shape: f32[2,128], index: 12, kind: output, shape index: {7}]
  %13 = xla_tuple %s5, %s6, %s7, %s8, %s9, %s10, %s11, %s12
  %s14 = sld [smem:[#allocation0]]
  $region94: #{craft_loss.3} parent=0
    _
  %s16 = ssub.s32 1, %s14
  %s17 = scalar_select 0, %s16, %s14
  // Predicated region
  $region2: #{craft_loss.3} parent=0 // pred_check
    _
  $region3: #{craft_loss.3} parent=0 // pred_check_branch
    %19 = sbr.rel (0) target = $region5
  $region4: #{craft_loss.3} parent=0 // pred_region
    _
  $region5: #{craft_loss.3} parent=0 // pred_fallthru
    _
  // Predicated region
  $region6: #{craft_loss.3} parent=0 // pred_check
    _
  $region7: #{craft_loss.3} parent=0 // pred_check_branch
    %21 = sbr.rel (0) target = $region9
  $region8: #{craft_loss.3} parent=0 // pred_region
    _
  $region9: #{craft_loss.3} parent=0 // pred_fallthru
    _
  // Predicated region
  $region10: #{craft_loss.3} parent=0 // pred_check
    _
  $region11: #{craft_loss.3} parent=0 // pred_check_branch
    %23 = sbr.rel (0) target = $region13
  $region12: #{craft_loss.3} parent=0 // pred_region
    _
  $region13: #{craft_loss.3} parent=0 // pred_fallthru
    _
  // Predicated region
  $region14: #{craft_loss.3} parent=0 // pred_check
    _
  $region15: #{craft_loss.3} parent=0 // pred_check_branch
    %25 = sbr.rel (0) target = $region17
  $region16: #{craft_loss.3} parent=0 // pred_region
    _
  $region17: #{craft_loss.3} parent=0 // pred_fallthru
    _
  // Predicated region
  $region18: #{craft_loss.3} parent=0 // pred_check
    _
  $region19: #{craft_loss.3} parent=0 // pred_check_branch
    %27 = sbr.rel (0) target = $region21
  $region20: #{craft_loss.3} parent=0 // pred_region
    _
  $region21: #{craft_loss.3} parent=0 // pred_fallthru
    _
  %p28 = scmp.eq.s32.totalorder 0, 0
  // Predicated region
  $region22: #{craft_loss.3} parent=0 // pred_check
    %p29 = pneg %p28
  $region23: #{craft_loss.3} parent=0 // pred_check_branch
    %31 = sbr.rel (%p29) target = $region25
  $region24: #{craft_loss.3} parent=0 // pred_region
    %32 = vst [vmem:[#allocation2] sm:$0xff] 0.0
    %33 = vst [vmem:[#allocation3] sm:$0xff] 0.0
    %34 = vst [vmem:[#allocation4] sm:$0xff] 0.0
    %35 = vst [vmem:[#allocation5] sm:$0xff] 0.0
    %36 = vst [vmem:[#allocation6] sm:$0xff] 0.0
    %37 = vst [vmem:[#allocation7] sm:$0xff] 0.0
  $region25: #{craft_loss.3} parent=0 // pred_fallthru
    _
  %v38 = vld [vmem:[%s4] sm:$0xff]
  %v39 = vld [vmem:[%s0] sm:$0xff]
  %v40 = vld [vmem:[%s2] sm:$0xff]
  %v41 = vsub.f32 %v40, %v39
  %v42 = vmul.f32 %v41, %v41
  %v43 = vmul.f32 %v42, %v38
  %vm44 = vcmp.ge.f32.partialorder %v39, 0.1
  %v45 = vsel %vm44, 1, 0
  %v46 = vcvt.s32.f32 %v45
  %v47 = vld [vmem:[#allocation2] sm:$0xff]
  %v48 = vadd.f32 %v47, %v46
  %49 = vst [vmem:[#allocation2] sm:$0xff] %v48
  %v50 = vld [vmem:[#allocation3] sm:$0xff]
  %v51 = vmul.f32 %v43, %v46
  %v52 = vadd.f32 %v50, %v51
  %53 = vst [vmem:[#allocation3] sm:$0xff] %v52
  %v54 = vld [vmem:[#allocation4] sm:$0xff]
  %v55 = vsel %vm44, 0.0, %v43
  %v56 = vadd.f32 %v54, %v55
  %57 = vst [vmem:[#allocation4] sm:$0xff] %v56
  %v58 = vsel %vm44, -1.0, %v43
  %59 = vst [vmem:[%s5] sm:$0xff] %v58
  %v60 = vld [vmem:[%s1] sm:$0xff]
  %v61 = vld [vmem:[%s3] sm:$0xff]
  %v62 = vsub.f32 %v61, %v60
  %v63 = vmul.f32 %v62, %v62
  %v64 = vmul.f32 %v63, %v38
  %vm65 = vcmp.ge.f32.partialorder %v60, 0.1
  %v66 = vsel %vm65, 1, 0
  %v67 = vcvt.s32.f32 %v66
  %v68 = vld [vmem:[#allocation5] sm:$0xff]
  %v69 = vadd.f32 %v68, %v67
  %70 = vst [vmem:[#allocation5] sm:$0xff] %v69
  %v71 = vld [vmem:[#allocation6] sm:$0xff]
  %v72 = vmul.f32 %v64, %v67
  %v73 = vadd.f32 %v71, %v72
  %74 = vst [vmem:[#allocation6] sm:$0xff] %v73
  %v75 = vld [vmem:[#allocation7] sm:$0xff]
  %v76 = vsel %vm65, 0.0, %v64
  %v77 = vadd.f32 %v75, %v76
  %78 = vst [vmem:[#allocation7] sm:$0xff] %v77
  %v79 = vsel %vm65, -1.0, %v64
  %80 = vst [vmem:[%s6] sm:$0xff] %v79
  // Predicated region
  $region26: #{craft_loss.3} parent=0 // pred_check
    %p81 = pneg %p28
  $region27: #{craft_loss.3} parent=0 // pred_check_branch
    %83 = sbr.rel (%p81) target = $region29
  $region28: #{craft_loss.3} parent=0 // pred_region
    %v84 = vld [vmem:[#allocation2] sm:$0xff]
    %86 = vst [vmem:[#allocation1] ss:$4 sm:$0xff] %v84
    %v87 = vld.sshfl [vmem:[#allocation1] sm:$0xff pattern:$0x73625140]
    %v88 = vld.sshfl [vmem:[#allocation1 + $0x8] sm:$0xff pattern:$0x73625140]
    %v89 = vld.sshfl [vmem:[#allocation1 + $0x10] sm:$0xff pattern:$0x73625140]
    %v90 = vld.sshfl [vmem:[#allocation1 + $0x18] sm:$0xff pattern:$0x73625140]
    %vm95 = vcmask 1041408
    %v96 = vsel %vm95, %v87, 0.0
    %v97 = vsel %vm95, %v88, 0.0
    %v98 = vadd.f32 %v96, %v97
    %v99 = vsel %vm95, %v89, 0.0
    %v100 = vadd.f32 %v98, %v99
    %v101 = vsel %vm95, %v90, 0.0
    %v102 = vadd.f32 %v100, %v101
    %103 = vadd.xlane.f32.xlu0 %v102
    %v104 = vpop.xlane.xlu0 %103
    %105 = vst [vmem:[%s7] sm:$0x3] %v104
    %v106 = vld [vmem:[#allocation3] sm:$0xff]
    %108 = vst [vmem:[#allocation1] ss:$4 sm:$0xff] %v106
    %v109 = vld.sshfl [vmem:[#allocation1] sm:$0xff pattern:$0x73625140]
    %v110 = vld.sshfl [vmem:[#allocation1 + $0x8] sm:$0xff pattern:$0x73625140]
    %v111 = vld.sshfl [vmem:[#allocation1 + $0x10] sm:$0xff pattern:$0x73625140]
    %v112 = vld.sshfl [vmem:[#allocation1 + $0x18] sm:$0xff pattern:$0x73625140]
    %v117 = vsel %vm95, %v109, 0.0
    %v118 = vsel %vm95, %v110, 0.0
    %v119 = vadd.f32 %v117, %v118
    %v120 = vsel %vm95, %v111, 0.0
    %v121 = vadd.f32 %v119, %v120
    %v122 = vsel %vm95, %v112, 0.0
    %v123 = vadd.f32 %v121, %v122
    %124 = vadd.xlane.f32.xlu0 %v123
    %v125 = vpop.xlane.xlu0 %124
    %126 = vst [vmem:[%s8] sm:$0x3] %v125
    %v127 = vld [vmem:[#allocation4] sm:$0xff]
    %129 = vst [vmem:[#allocation1] ss:$4 sm:$0xff] %v127
    %v130 = vld.sshfl [vmem:[#allocation1] sm:$0xff pattern:$0x73625140]
    %v131 = vld.sshfl [vmem:[#allocation1 + $0x8] sm:$0xff pattern:$0x73625140]
    %v132 = vld.sshfl [vmem:[#allocation1 + $0x10] sm:$0xff pattern:$0x73625140]
    %v133 = vld.sshfl [vmem:[#allocation1 + $0x18] sm:$0xff pattern:$0x73625140]
    %v138 = vsel %vm95, %v130, 0.0
    %v139 = vsel %vm95, %v131, 0.0
    %v140 = vadd.f32 %v138, %v139
    %v141 = vsel %vm95, %v132, 0.0
    %v142 = vadd.f32 %v140, %v141
    %v143 = vsel %vm95, %v133, 0.0
    %v144 = vadd.f32 %v142, %v143
    %145 = vadd.xlane.f32.xlu0 %v144
    %v146 = vpop.xlane.xlu0 %145
    %147 = vst [vmem:[%s9] sm:$0x3] %v146
    %v148 = vld [vmem:[#allocation5] sm:$0xff]
    %150 = vst [vmem:[#allocation1] ss:$4 sm:$0xff] %v148
    %v151 = vld.sshfl [vmem:[#allocation1] sm:$0xff pattern:$0x73625140]
    %v152 = vld.sshfl [vmem:[#allocation1 + $0x8] sm:$0xff pattern:$0x73625140]
    %v153 = vld.sshfl [vmem:[#allocation1 + $0x10] sm:$0xff pattern:$0x73625140]
    %v154 = vld.sshfl [vmem:[#allocation1 + $0x18] sm:$0xff pattern:$0x73625140]
    %v159 = vsel %vm95, %v151, 0.0
    %v160 = vsel %vm95, %v152, 0.0
    %v161 = vadd.f32 %v159, %v160
    %v162 = vsel %vm95, %v153, 0.0
    %v163 = vadd.f32 %v161, %v162
    %v164 = vsel %vm95, %v154, 0.0
    %v165 = vadd.f32 %v163, %v164
    %166 = vadd.xlane.f32.xlu0 %v165
    %v167 = vpop.xlane.xlu0 %166
    %168 = vst [vmem:[%s10] sm:$0x3] %v167
    %v169 = vld [vmem:[#allocation6] sm:$0xff]
    %171 = vst [vmem:[#allocation1] ss:$4 sm:$0xff] %v169
    %v172 = vld.sshfl [vmem:[#allocation1] sm:$0xff pattern:$0x73625140]
    %v173 = vld.sshfl [vmem:[#allocation1 + $0x8] sm:$0xff pattern:$0x73625140]
    %v174 = vld.sshfl [vmem:[#allocation1 + $0x10] sm:$0xff pattern:$0x73625140]
    %v175 = vld.sshfl [vmem:[#allocation1 + $0x18] sm:$0xff pattern:$0x73625140]
    %v180 = vsel %vm95, %v172, 0.0
    %v181 = vsel %vm95, %v173, 0.0
    %v182 = vadd.f32 %v180, %v181
    %v183 = vsel %vm95, %v174, 0.0
    %v184 = vadd.f32 %v182, %v183
    %v185 = vsel %vm95, %v175, 0.0
    %v186 = vadd.f32 %v184, %v185
    %187 = vadd.xlane.f32.xlu0 %v186
    %v188 = vpop.xlane.xlu0 %187
    %189 = vst [vmem:[%s11] sm:$0x3] %v188
    %v190 = vld [vmem:[#allocation7] sm:$0xff]
    %192 = vst [vmem:[#allocation1] ss:$4 sm:$0xff] %v190
    %v193 = vld.sshfl [vmem:[#allocation1] sm:$0xff pattern:$0x73625140]
    %v194 = vld.sshfl [vmem:[#allocation1 + $0x8] sm:$0xff pattern:$0x73625140]
    %v195 = vld.sshfl [vmem:[#allocation1 + $0x10] sm:$0xff pattern:$0x73625140]
    %v196 = vld.sshfl [vmem:[#allocation1 + $0x18] sm:$0xff pattern:$0x73625140]
    %v201 = vsel %vm95, %v193, 0.0
    %v202 = vsel %vm95, %v194, 0.0
    %v203 = vadd.f32 %v201, %v202
    %v204 = vsel %vm95, %v195, 0.0
    %v205 = vadd.f32 %v203, %v204
    %v206 = vsel %vm95, %v196, 0.0
    %v207 = vadd.f32 %v205, %v206
    %208 = vadd.xlane.f32.xlu0 %v207
    %v209 = vpop.xlane.xlu0 %208
    %210 = vst [vmem:[%s12] sm:$0x3] %v209
  $region29: #{craft_loss.3} parent=0 // pred_fallthru
    _
  // Predicated region
  $region30: #{craft_loss.3} parent=0 // pred_check
    _
  $region31: #{craft_loss.3} parent=0 // pred_check_branch
    %212 = sbr.rel (0) target = $region33
  $region32: #{craft_loss.3} parent=0 // pred_region
    _
  $region33: #{craft_loss.3} parent=0 // pred_fallthru
    _
  // Predicated region
  $region34: #{craft_loss.3} parent=0 // pred_check
    _
  $region35: #{craft_loss.3} parent=0 // pred_check_branch
    %214 = sbr.rel (0) target = $region37
  $region36: #{craft_loss.3} parent=0 // pred_region
    _
  $region37: #{craft_loss.3} parent=0 // pred_fallthru
    _
  // Predicated region
  $region38: #{craft_loss.3} parent=0 // pred_check
    _
  $region39: #{craft_loss.3} parent=0 // pred_check_branch
    %216 = sbr.rel (0) target = $region41
  $region40: #{craft_loss.3} parent=0 // pred_region
    _
  $region41: #{craft_loss.3} parent=0 // pred_fallthru
    _
  // Predicated region
  $region42: #{craft_loss.3} parent=0 // pred_check
    _
  $region43: #{craft_loss.3} parent=0 // pred_check_branch
    %218 = sbr.rel (0) target = $region45
  $region44: #{craft_loss.3} parent=0 // pred_region
    _
  $region45: #{craft_loss.3} parent=0 // pred_fallthru
    _
  // Predicated region
  $region46: #{craft_loss.3} parent=0 // pred_check
    _
  $region47: #{craft_loss.3} parent=0 // pred_check_branch
    %220 = sbr.rel (0) target = $region49
  $region48: #{craft_loss.3} parent=0 // pred_region
    _
  $region49: #{craft_loss.3} parent=0 // pred_fallthru
    _
  // Predicated region
  $region50: #{craft_loss.3} parent=0 // pred_check
    _
  $region51: #{craft_loss.3} parent=0 // pred_check_branch
    %222 = sbr.rel (0) target = $region53
  $region52: #{craft_loss.3} parent=0 // pred_region
    _
  $region53: #{craft_loss.3} parent=0 // pred_fallthru
    _
  // Predicated region
  $region54: #{craft_loss.3} parent=0 // pred_check
    _
  $region55: #{craft_loss.3} parent=0 // pred_check_branch
    %224 = sbr.rel (0) target = $region57
  $region56: #{craft_loss.3} parent=0 // pred_region
    _
  $region57: #{craft_loss.3} parent=0 // pred_fallthru
    _
  // Predicated region
  $region58: #{craft_loss.3} parent=0 // pred_check
    _
  $region59: #{craft_loss.3} parent=0 // pred_check_branch
    %226 = sbr.rel (0) target = $region61
  $region60: #{craft_loss.3} parent=0 // pred_region
    _
  $region61: #{craft_loss.3} parent=0 // pred_fallthru
    _
  // Predicated region
  $region62: #{craft_loss.3} parent=0 // pred_check
    _
  $region63: #{craft_loss.3} parent=0 // pred_check_branch
    %228 = sbr.rel (0) target = $region65
  $region64: #{craft_loss.3} parent=0 // pred_region
    _
  $region65: #{craft_loss.3} parent=0 // pred_fallthru
    _
  // Predicated region
  $region66: #{craft_loss.3} parent=0 // pred_check
    _
  $region67: #{craft_loss.3} parent=0 // pred_check_branch
    %230 = sbr.rel (0) target = $region69
  $region68: #{craft_loss.3} parent=0 // pred_region
    _
  $region69: #{craft_loss.3} parent=0 // pred_fallthru
    _
  // Predicated region
  $region70: #{craft_loss.3} parent=0 // pred_check
    _
  $region71: #{craft_loss.3} parent=0 // pred_check_branch
    %232 = sbr.rel (0) target = $region73
  $region72: #{craft_loss.3} parent=0 // pred_region
    _
  $region73: #{craft_loss.3} parent=0 // pred_fallthru
    _
  // Predicated region
  $region74: #{craft_loss.3} parent=0 // pred_check
    _
  $region75: #{craft_loss.3} parent=0 // pred_check_branch
    %234 = sbr.rel (0) target = $region77
  $region76: #{craft_loss.3} parent=0 // pred_region
    _
  $region77: #{craft_loss.3} parent=0 // pred_fallthru
    _
  // Predicated region
  $region78: #{craft_loss.3} parent=0 // pred_check
    _
  $region79: #{craft_loss.3} parent=0 // pred_check_branch
    %236 = sbr.rel (0) target = $region81
  $region80: #{craft_loss.3} parent=0 // pred_region
    _
  $region81: #{craft_loss.3} parent=0 // pred_fallthru
    _
  // Predicated region
  $region82: #{craft_loss.3} parent=0 // pred_check
    _
  $region83: #{craft_loss.3} parent=0 // pred_check_branch
    %238 = sbr.rel (0) target = $region85
  $region84: #{craft_loss.3} parent=0 // pred_region
    _
  $region85: #{craft_loss.3} parent=0 // pred_fallthru
    _
  // Predicated region
  $region86: #{craft_loss.3} parent=0 // pred_check
    _
  $region87: #{craft_loss.3} parent=0 // pred_check_branch
    %240 = sbr.rel (0) target = $region89
  $region88: #{craft_loss.3} parent=0 // pred_region
    _
  $region89: #{craft_loss.3} parent=0 // pred_fallthru
    _
  // Predicated region
  $region90: #{craft_loss.3} parent=0 // pred_check
    _
  $region91: #{craft_loss.3} parent=0 // pred_check_branch
    %242 = sbr.rel (0) target = $region93
  $region92: #{craft_loss.3} parent=0 // pred_region
    _
  $region93: #{craft_loss.3} parent=0 // pred_fallthru
    _

// kernel: craft_loss.5
$region0: #{craft_loss.5}
  #allocation0 [shape = 'u32[]', space=smem, size = 0x4, offset = 0x4, fixed_abs, tag = 'smem constant byte address 0x4 - core index']
  #allocation1 [shape = 'u32[72,128]{1,0:T(1,128)}', space=vmem, size = 0x9000, scoped, tag = 'internal scratch']
  #allocation2 [shape = 'f32[2,512]{1,0:T(2,128)}', space=vmem, size = 0x1000, scoped, tag = 'scratch operand']
  #allocation3 [shape = 'f32[2,512]{1,0:T(2,128)}', space=vmem, size = 0x1000, scoped, tag = 'scratch operand']
  #allocation4 [shape = 's32[1]{0}', space=sflag, size = 0x4, scoped, tag = 'scoped memory for craft_loss.5']
  #allocation5 [shape = 's32[1]{0:T(128)S(6)}', space=smem, size = 0x200, scoped, tag = 'prefetched SMEM operand 0']
  %s0 = inlined_call_operand.<no memory space> [shape: s32[1], index: 0, kind: input, shape index: {}]
  %s1 = inlined_call_operand.vmem [shape: f32[2,512], index: 1, kind: input, shape index: {}]
  %s2 = inlined_call_operand.vmem [shape: f32[2,128], index: 2, kind: input, shape index: {}]
  %s3 = inlined_call_operand.vmem [shape: f32[2,128], index: 3, kind: input, shape index: {}]
  %s4 = inlined_call_operand.vmem [shape: f32[2,128], index: 4, kind: input, shape index: {}]
  %s5 = inlined_call_operand.vmem [shape: f32[2,128], index: 5, kind: output, shape index: {}]
  %s6 = sld [smem:[#allocation0]]
  $region38: #{craft_loss.5} parent=0
    _
  %s8 = ssub.s32 1, %s6
  %s9 = scalar_select 0, %s8, %s6
  %10 = sst [smem:[#allocation5]] %s0
  // Predicated region
  $region2: #{craft_loss.5} parent=0 // pred_check
    _
  $region3: #{craft_loss.5} parent=0 // pred_check_branch
    %12 = sbr.rel (0) target = $region5
  $region4: #{craft_loss.5} parent=0 // pred_region
    %s13 = sld [smem:[#allocation5]]
    %p14 = scmp.gt.s32.totalorder 0, %s13
    %s15 = scalar_select %p14, 0, %s13
    %s16 = smul.u32 4, %s15
    %p17 = scmp.lt.s32.totalorder %s16, 3
    %s18 = scalar_select %p17, %s16, 3
    %s19 = smul.addr %s18, 2
    %s20 = scalar_lea.vmem %s1, %s19
    %s21 = sld [smem:[#allocation5]]
    %p22 = scmp.gt.s32.totalorder 0, %s21
    %s23 = scalar_select %p22, 0, %s21
    %s24 = smul.u32 4, %s23
  $region5: #{craft_loss.5} parent=0 // pred_fallthru
    _
  // Predicated region
  $region6: #{craft_loss.5} parent=0 // pred_check
    _
  $region7: #{craft_loss.5} parent=0 // pred_check_branch
    %26 = sbr.rel (0) target = $region9
  $region8: #{craft_loss.5} parent=0 // pred_region
    _
  $region9: #{craft_loss.5} parent=0 // pred_fallthru
    _
  // Predicated region
  $region10: #{craft_loss.5} parent=0 // pred_check
    _
  $region11: #{craft_loss.5} parent=0 // pred_check_branch
    %28 = sbr.rel (0) target = $region13
  $region12: #{craft_loss.5} parent=0 // pred_region
    _
  $region13: #{craft_loss.5} parent=0 // pred_fallthru
    _
  // Predicated region
  $region14: #{craft_loss.5} parent=0 // pred_check
    _
  $region15: #{craft_loss.5} parent=0 // pred_check_branch
    %30 = sbr.rel (0) target = $region17
  $region16: #{craft_loss.5} parent=0 // pred_region
    _
  $region17: #{craft_loss.5} parent=0 // pred_fallthru
    _
  %s31 = sld [smem:[#allocation5]]
  %p32 = scmp.gt.s32.totalorder 0, %s31
  %s33 = scalar_select %p32, 0, %s31
  %s34 = smul.u32 4, %s33
  %p35 = scmp.lt.s32.totalorder %s34, 3
  %s36 = scalar_select %p35, %s34, 3
  %s37 = smul.addr %s36, 2
  %s38 = scalar_lea.vmem %s1, %s37
  %s39 = sld [smem:[#allocation5]]
  %p40 = scmp.gt.s32.totalorder 0, %s39
  %s41 = scalar_select %p40, 0, %s39
  %s42 = smul.u32 4, %s41
  %p43 = scmp.lt.s32.totalorder %s42, 3
  %s44 = scalar_select %p43, %s42, 3
  %s45 = smul.addr %s44, 2
  %s46 = scalar_lea.vmem %s1, %s45
  %s47 = sld [smem:[#allocation5]]
  %p48 = scmp.gt.s32.totalorder 0, %s47
  %s49 = scalar_select %p48, 0, %s47
  %s50 = smul.u32 4, %s49
  %p51 = scmp.eq.s32.totalorder 0, 0
  // Predicated region
  $region18: #{craft_loss.5} parent=0 // pred_check
    %p52 = pneg %p51
  $region19: #{craft_loss.5} parent=0 // pred_check_branch
    %54 = sbr.rel (%p52) target = $region21
  $region20: #{craft_loss.5} parent=0 // pred_region
    %55 = vst [vmem:[#allocation2] sm:$0xff] 0.0
    %56 = vst [vmem:[#allocation3] sm:$0xff] 0.0
  $region21: #{craft_loss.5} parent=0 // pred_fallthru
    _
  %v57 = vld [vmem:[%s2] sm:$0x3]
  %v58 = vcvt.f32.s32.to.zero.pseudo %v57
  %v59 = vmul.u32 %v58, 3
  %v60 = vsub.s32 512, %v59
  %s61 = sld [smem:[#allocation5]]
  %p62 = scmp.ge.s32.totalorder 0, %s61
  // Predicated region
  $region22: #{craft_loss.5} parent=0 // pred_check
    %p63 = pneg %p62
  $region23: #{craft_loss.5} parent=0 // pred_check_branch
    %65 = sbr.rel (%p63) target = $region25
  $region24: #{craft_loss.5} parent=0 // pred_region
    %v66 = vld [vmem:[%s46] sm:$0xff]
    %v67 = vlaneseq
    %v68 = vand.u32 %v67, 127
    %v69 = vadd.s32 %v68, 128
    %v70 = vadd.s32 %v68, 256
    %v71 = vadd.s32 %v68, 384
    %s72 = smul.u32 0, 512
    %v73 = vstv %s72
    %v74 = vadd.s32 %v68, %v73
    %v75 = vadd.s32 %v69, %v73
    %v76 = vadd.s32 %v70, %v73
    %v77 = vadd.s32 %v71, %v73
    %v78 = vld [vmem:[#allocation2] sm:$0xff]
    %79 = vset.pattern.permute.xlu0 0
    %80 = vperm.xlu0 %79, %v60
    %v81 = vpop.permute.xlu0 %80
    %vm82 = vcmp.ge.s32.totalorder %v74, %v81
    %vm83 = vcmp.ge.s32.totalorder %v75, %v81
    %vm84 = vcmp.ge.s32.totalorder %v76, %v81
    %vm85 = vcmp.ge.s32.totalorder %v77, %v81
    %87 = vst [vmem:[#allocation1] ss:$4 sm:$0xff] %v66
    %v88 = vld.sshfl [vmem:[#allocation1] sm:$0xff pattern:$0x73625140]
    %v89 = vld.sshfl [vmem:[#allocation1 + $0x8] sm:$0xff pattern:$0x73625140]
    %v90 = vld.sshfl [vmem:[#allocation1 + $0x10] sm:$0xff pattern:$0x73625140]
    %v91 = vld.sshfl [vmem:[#allocation1 + $0x18] sm:$0xff pattern:$0x73625140]
    %v96 = vsel %vm82, %v88, 0.0
    %v97 = vsel %vm83, %v89, 0.0
    %v98 = vsel %vm84, %v90, 0.0
    %v99 = vsel %vm85, %v91, 0.0
    %v104 = vrot.slane %v97, 6
    %v105 = vrot.slane %v98, 4
    %v106 = vrot.slane %v99, 2
    %vm107 = vcmask 1041408
    %v108 = vsel %vm107, %v96, %v104
    %vm109 = vcmask 1045508
    %v110 = vsel %vm109, %v105, %v106
    %vm111 = vcmask 1043456
    %v112 = vsel %vm111, %v108, %v110
    %v114 = vadd.f32 %v78, %v112
    %115 = vst [vmem:[#allocation2] sm:$0xff] %v114
    %v116 = vld [vmem:[#allocation3] sm:$0xff]
    %vm117 = vcmp.ge.s32.totalorder %v74, 12
    %vm118 = vcmp.ge.s32.totalorder %v75, 12
    %vm119 = vcmp.ge.s32.totalorder %v76, 12
    %vm120 = vcmp.ge.s32.totalorder %v77, 12
    %121 = vst [vmem:[#allocation1] ss:$4 sm:$0xff] %v66
    %v122 = vld.sshfl [vmem:[#allocation1] sm:$0xff pattern:$0x73625140]
    %v123 = vld.sshfl [vmem:[#allocation1 + $0x8] sm:$0xff pattern:$0x73625140]
    %v124 = vld.sshfl [vmem:[#allocation1 + $0x10] sm:$0xff pattern:$0x73625140]
    %v125 = vld.sshfl [vmem:[#allocation1 + $0x18] sm:$0xff pattern:$0x73625140]
    %v130 = vsel %vm117, %v122, 0.0
    %v131 = vsel %vm118, %v123, 0.0
    %v132 = vsel %vm119, %v124, 0.0
    %v133 = vsel %vm120, %v125, 0.0
    %v138 = vrot.slane %v131, 6
    %v139 = vrot.slane %v132, 4
    %v140 = vrot.slane %v133, 2
    %v141 = vsel %vm107, %v130, %v138
    %v142 = vsel %vm109, %v139, %v140
    %v143 = vsel %vm111, %v141, %v142
    %v145 = vadd.f32 %v116, %v143
    %146 = vst [vmem:[#allocation3] sm:$0xff] %v145
  $region25: #{craft_loss.5} parent=0 // pred_fallthru
    _
  // Predicated region
  $region26: #{craft_loss.5} parent=0 // pred_check
    %p147 = pneg %p51
  $region27: #{craft_loss.5} parent=0 // pred_check_branch
    %149 = sbr.rel (%p147) target = $region29
  $region28: #{craft_loss.5} parent=0 // pred_region
    %v150 = vld [vmem:[%s3] sm:$0x3]
    %v151 = vld [vmem:[%s4] sm:$0x3]
    %v152 = vsub.f32 512.0, %v57
    %v153 = vmul.f32 %v57, 3.0
    %v154 = vmax.f32 %v57, 1.0
    %v155 = vrcp.pop %v154
    %v156 = vmul.f32 %v154, %v155
    %v157 = vsub.f32 1.0, %v156
    %v158 = vmul.f32 %v155, %v157
    %v159 = vadd.f32 %v155, %v158
    %vm160 = vweird.f32 %v154
    %vm161 = vweird.f32 %v155
    %vm162 = vmor %vm160, %vm161
    %v163 = vsel %vm162, %v155, %v159
    %v164 = vand.u32 2147483647, %v154
    %vm165 = vcmp.eq.f32.partialorder %v164, 8.507059e+37
    %v166 = vand.u32 %v154, 2147483648
    %v167 = vor.u32 1.1754944e-38, %v166
    %v168 = vsel %vm165, %v167, %v163
    %v169 = vmul.f32 %v150, %v168
    %v170 = vmax.f32 %v152, 1.0
    %v171 = vrcp.pop %v170
    %v172 = vmul.f32 %v170, %v171
    %v173 = vsub.f32 1.0, %v172
    %v174 = vmul.f32 %v171, %v173
    %v175 = vadd.f32 %v171, %v174
    %vm176 = vweird.f32 %v170
    %vm177 = vweird.f32 %v171
    %vm178 = vmor %vm176, %vm177
    %v179 = vsel %vm178, %v171, %v175
    %v180 = vand.u32 2147483647, %v170
    %vm181 = vcmp.eq.f32.partialorder %v180, 8.507059e+37
    %v182 = vand.u32 %v170, 2147483648
    %v183 = vor.u32 1.1754944e-38, %v182
    %v184 = vsel %vm181, %v183, %v179
    %v185 = vmul.f32 %v151, %v184
    %v186 = vld [vmem:[#allocation2] sm:$0xff]
    %188 = vst [vmem:[#allocation1] ss:$4 sm:$0xff] %v186
    %v189 = vld.sshfl [vmem:[#allocation1] sm:$0xff pattern:$0x73625140]
    %v190 = vld.sshfl [vmem:[#allocation1 + $0x8] sm:$0xff pattern:$0x73625140]
    %v191 = vld.sshfl [vmem:[#allocation1 + $0x10] sm:$0xff pattern:$0x73625140]
    %v192 = vld.sshfl [vmem:[#allocation1 + $0x18] sm:$0xff pattern:$0x73625140]
    %vm197 = vcmask 1041408
    %v198 = vsel %vm197, %v189, 0.0
    %v199 = vsel %vm197, %v190, 0.0
    %v200 = vadd.f32 %v198, %v199
    %v201 = vsel %vm197, %v191, 0.0
    %v202 = vadd.f32 %v200, %v201
    %v203 = vsel %vm197, %v192, 0.0
    %v204 = vadd.f32 %v202, %v203
    %205 = vadd.xlane.f32.xlu0 %v204
    %v206 = vpop.xlane.xlu0 %205
    %v207 = vmax.f32 %v153, 1.0
    %v208 = vrcp.pop %v207
    %v209 = vmul.f32 %v207, %v208
    %v210 = vsub.f32 1.0, %v209
    %v211 = vmul.f32 %v208, %v210
    %v212 = vadd.f32 %v208, %v211
    %vm213 = vweird.f32 %v207
    %vm214 = vweird.f32 %v208
    %vm215 = vmor %vm213, %vm214
    %v216 = vsel %vm215, %v208, %v212
    %v217 = vand.u32 2147483647, %v207
    %vm218 = vcmp.eq.f32.partialorder %v217, 8.507059e+37
    %v219 = vand.u32 %v207, 2147483648
    %v220 = vor.u32 1.1754944e-38, %v219
    %v221 = vsel %vm218, %v220, %v216
    %v222 = vmul.f32 %v206, %v221
    %vm223 = vcmp.lt.f32.partialorder %v152, %v153
    %v224 = vsel %vm223, %v185, %v222
    %v225 = vld [vmem:[#allocation3] sm:$0xff]
    %227 = vst [vmem:[#allocation1] ss:$4 sm:$0xff] %v225
    %v228 = vld.sshfl [vmem:[#allocation1] sm:$0xff pattern:$0x73625140]
    %v229 = vld.sshfl [vmem:[#allocation1 + $0x8] sm:$0xff pattern:$0x73625140]
    %v230 = vld.sshfl [vmem:[#allocation1 + $0x10] sm:$0xff pattern:$0x73625140]
    %v231 = vld.sshfl [vmem:[#allocation1 + $0x18] sm:$0xff pattern:$0x73625140]
    %v236 = vsel %vm197, %v228, 0.0
    %v237 = vsel %vm197, %v229, 0.0
    %v238 = vadd.f32 %v236, %v237
    %v239 = vsel %vm197, %v230, 0.0
    %v240 = vadd.f32 %v238, %v239
    %v241 = vsel %vm197, %v231, 0.0
    %v242 = vadd.f32 %v240, %v241
    %243 = vadd.xlane.f32.xlu0 %v242
    %v244 = vpop.xlane.xlu0 %243
    %v245 = vrcp.pop 500.0
    %v246 = vmul.f32 500.0, %v245
    %v247 = vsub.f32 1.0, %v246
    %v248 = vmul.f32 %v245, %v247
    %v249 = vadd.f32 %v245, %v248
    %vm250 = vweird.f32 %v245
    %v251 = vsel %vm250, %v245, %v249
    %v252 = vmul.f32 %v244, %v251
    %vm253 = vcmp.gt.f32.partialorder %v57, 0.0
    %v254 = vadd.f32 %v169, %v224
    %v255 = vsel %vm253, %v254, %v252
    %257 = vset.pattern.permute.xlu0 0
    %258 = vperm.xlu0 %257, %v255
    %v259 = vpop.permute.xlu0 %258
    %261 = vst [vmem:[%s5] sm:$0x3] %v259
  $region29: #{craft_loss.5} parent=0 // pred_fallthru
    _
  // Predicated region
  $region30: #{craft_loss.5} parent=0 // pred_check
    _
  $region31: #{craft_loss.5} parent=0 // pred_check_branch
    %263 = sbr.rel (0) target = $region33
  $region32: #{craft_loss.5} parent=0 // pred_region
    _
  $region33: #{craft_loss.5} parent=0 // pred_fallthru
    _
  // Predicated region
  $region34: #{craft_loss.5} parent=0 // pred_check
    _
  $region35: #{craft_loss.5} parent=0 // pred_check_branch
    %265 = sbr.rel (0) target = $region37
  $region36: #{craft_loss.5} parent=0 // pred_region
    _
  $region37: #{craft_loss.5} parent=0 // pred_fallthru
    _

</llo_original>
